<compile_context>
chip_gen: v7x
topology: tpu7x:2x2x1
jax: 0.10.0
libtpu: 0.0.40
codegen_flags: <defaults>
</compile_context>

<pallas_src>
import jax
import jax.numpy as jnp
import numpy as np
from jax.experimental import pallas as pl
from jax.experimental.pallas import tpu as pltpu

_LANES = 128


def _identity_copy_kernel(x_ref, o_ref):
    # Identity forward: emit the block unchanged.
    o_ref[...] = x_ref[...]


def _copy_table(x: jax.Array, *, row_tile: int = 512,
                vmem_limit_bytes: int = 32 * 1024 * 1024) -> jax.Array:
    """Materialize a copy of one embedding table with a lane-dense Pallas kernel."""
    rows, cols = x.shape
    total = rows * cols

    # Lane-dense reshaping: emb_size < 128 would waste 75%+ of the vst lane
    # width; a bitwise reshape to 128-wide rows makes every store full-width.
    if total % _LANES == 0:
        slab = x.reshape(total // _LANES, _LANES)
    else:
        slab = x  # fallback: keep original layout (full-array block below)
    s_rows, s_cols = slab.shape

    # Tile selection: full-array block (grid of 1) for small tables; large
    # row tiles for production-sized tables.  512 x 128 x 4B = 256 KiB per
    # tile, well inside the VMEM budget of every generation even with
    # double-buffering of input + output.
    if s_rows > row_tile and s_rows % row_tile == 0:
        block = (row_tile, s_cols)
        grid = (s_rows // row_tile,)
        index_map = lambda i: (i, 0)
    else:
        block = (s_rows, s_cols)
        grid = (1,)
        index_map = lambda i: (0, 0)

    spec = pl.BlockSpec(block, index_map)

    out = pl.pallas_call(
        _identity_copy_kernel,
        out_shape=jax.ShapeDtypeStruct(slab.shape, slab.dtype),
        grid=grid,
        in_specs=[spec],
        out_specs=spec,
        # Alias input 0 -> output 0: the pass-through does not allocate or
        # rewrite a fresh HBM table when the caller donates the buffer.
        input_output_aliases={0: 0},
        compiler_params=pltpu.CompilerParams(
            dimension_semantics=("parallel",),
            vmem_limit_bytes=vmem_limit_bytes,
        ),
    )(slab)
    return out.reshape(rows, cols)


def mf_forward(user_emb: jax.Array, item_emb: jax.Array, *, materialize: bool = True):
    """Pallas implementation of Matrix_Factorization.forward().

    materialize=False is the exact PyTorch semantic (return the parameter
    tensors by reference, zero HBM traffic).  materialize=True runs the
    aliased, lane-dense Pallas copy kernel per table.
    """
    if not materialize:
        return user_emb, item_emb
    # Two independent pallas_calls: each table gets its own grid sized to its
    # own row count (no shared clamped grid, no wasted iterations).
    return _copy_table(user_emb), _copy_table(item_emb)


def xavier_uniform(key, shape, dtype=jnp.float32):
    """nn.init.xavier_uniform_ for a 2D tensor: U(-a, a), a=sqrt(6/(fan_in+fan_out))."""
    fan_out, fan_in = shape[0], shape[1]  # torch: fan_in = cols, fan_out = rows
    bound = (6.0 / (fan_in + fan_out)) ** 0.5
    return jax.random.uniform(key, shape, dtype=dtype, minval=-bound, maxval=bound)


if __name__ == "__main__":
    # Deterministic parameter setup mimicking Matrix_Factorization.__init__:
    #   data.user_num = 64, data.item_num = 128, emb_size = 32
    user_num, item_num, emb_size = 64, 128, 32

    key = jax.random.PRNGKey(0)
    k_user, k_item = jax.random.split(key)
    user_emb = xavier_uniform(k_user, (user_num, emb_size))
    item_emb = xavier_uniform(k_item, (item_num, emb_size))

    # Host-side copies of the expected values (robust against buffer aliasing).
    user_expected = np.asarray(user_emb)
    item_expected = np.asarray(item_emb)

    u_out, i_out = mf_forward(user_emb, item_emb)
    jax.block_until_ready((u_out, i_out))

    assert u_out.shape == (user_num, emb_size) and u_out.dtype == user_emb.dtype
    assert i_out.shape == (item_num, emb_size) and i_out.dtype == item_emb.dtype
    assert np.array_equal(np.asarray(u_out), user_expected)
    assert np.array_equal(np.asarray(i_out), item_expected)

    # Zero-cost pass-through path (exact PyTorch semantics).
    u_ref, i_ref = mf_forward(user_emb, item_emb, materialize=False)
    assert u_ref is user_emb and i_ref is item_emb

    # TODO(synk): the PyTorch forward() has no score computation; a future
    # rating = user_emb @ item_emb.T kernel should pad emb_size (K) to 128 and
    # use 256-based MXU tiles on v6e/v7x (128-based on v5e).
    print("KERNEL_OK")
</pallas_src>

<mosaic_0001>
module attributes {stable_mosaic.version = 11 : i64} {
  func.func @_identity_copy_kernel(%arg0: i32, %arg1: memref<16x128xf32, #tpu.memory_space<vmem>>, %arg2: memref<16x128xf32, #tpu.memory_space<vmem>>) attributes {dimension_semantics = [#tpu.dimension_semantics<parallel>], iteration_bounds = array<i64: 1>, scalar_prefetch = 0 : i64, scratch_operands = 0 : i64, tpu.core_type = #tpu.core_type<tc>, window_params = [{pipeline_mode = #tpu.pipeline_mode<synchronous>, transform_indices = @transform_0, window_bounds = array<i64: 16, 128>}, {pipeline_mode = #tpu.pipeline_mode<synchronous>, transform_indices = @transform_1, window_bounds = array<i64: 16, 128>}]} {
    %c0 = arith.constant 0 : index
    %c0_0 = arith.constant 0 : index
    %0 = vector.load %arg1[%c0, %c0_0] : memref<16x128xf32, #tpu.memory_space<vmem>>, vector<16x128xf32>
    %c0_1 = arith.constant 0 : index
    %c0_2 = arith.constant 0 : index
    %1 = vector.load %arg2[%c0_1, %c0_2] : memref<16x128xf32, #tpu.memory_space<vmem>>, vector<16x128xf32>
    tpu.vector_store %arg2[%c0_1, %c0_2], %0 {strides = array<i32>} : memref<16x128xf32, #tpu.memory_space<vmem>>, vector<16x128xf32>,
    return
  }
  func.func @transform_0(%arg0: i32) -> (i32, i32) {
    %c0_i32 = arith.constant 0 : i32
    %c0_i32_0 = arith.constant 0 : i32
    %c0_i32_1 = arith.constant 0 : i32
    return %c0_i32, %c0_i32_0 : i32, i32
  }
  func.func @transform_1(%arg0: i32) -> (i32, i32) {
    %c0_i32 = arith.constant 0 : i32
    %c0_i32_0 = arith.constant 0 : i32
    %c0_i32_1 = arith.constant 0 : i32
    return %c0_i32, %c0_i32_0 : i32, i32
  }
}

</mosaic_0001>

<llo_original>
// kernel: tpu_custom_call.1
$region0: #{tpu_custom_call.1}
  #allocation0 [shape = 'u32[]', space=smem, size = 0x4, offset = 0x4, fixed_abs, tag = 'smem constant byte address 0x4 - core index']
  #allocation1 [shape = 'u32[144,128]{1,0:T(1,128)}', space=vmem, size = 0x12000, scoped, tag = 'internal scratch']
  %s0 = inlined_call_operand.hbm [shape: f32[16,128], index: 0, kind: input, shape index: {}, may-alias: {0,1}]
  %s1 = inlined_call_operand.hbm [shape: f32[16,128], index: 1, kind: output, shape index: {}, may-alias: {0,1}]
  %s2 = sld [smem:[#allocation0]]
  $region18: #{tpu_custom_call.1} parent=0
    _
  %s4 = ssub.s32 1, %s2
  %s5 = scalar_select 0, %s4, %s2
  $region1: #{tpu_custom_call.1} parent=0
    #allocation2 [shape = 'u8[8192]{0}', space=vmem, size = 0x2000, scoped, tag = 'input window, operand 0, single buffered']
    #allocation3 [shape = 's32[1]{0}', space=sflag, size = 0x4, scoped, tag = 'scoped memory for tpu_custom_call.1']
    #allocation4 [shape = 's32[1]{0}', space=sflag, size = 0x4, scoped, tag = 'scoped memory for tpu_custom_call.1']
    #allocation5 [shape = 'u8[8192]{0}', space=vmem, size = 0x2000, scoped, tag = 'output window, operand 0, single buffered']
    %6 = vsyncpa [#allocation3], 0
    %7 = vsyncpa [#allocation4], 0
    // Predicated region
    $region2: #{tpu_custom_call.1} parent=1 // pred_check
      _
    $region3: #{tpu_custom_call.1} parent=1 // pred_check_branch
      %9 = sbr.rel (0) target = $region5
    $region4: #{tpu_custom_call.1} parent=1 // pred_region
      %s11 = ssub.s32 256, 256
      %12 = vsyncadd [#allocation3], %s11
      %s13 = sshll.u32 [#allocation2], 4
      %s14 = int_to_ptr.vmem [resolvable:$true] %s13
      %19 = dma.hbm_to_vmem [thread:$0]  %s0, 256, %s14, [#allocation3], 128, 128, 8
    $region5: #{tpu_custom_call.1} parent=1 // pred_fallthru
      _
    // Predicated region
    $region6: #{tpu_custom_call.1} parent=1 // pred_check
      _
    $region7: #{tpu_custom_call.1} parent=1 // pred_check_branch
      %21 = sbr.rel (0) target = $region9
    $region8: #{tpu_custom_call.1} parent=1 // pred_region
      %22 = dma.done [#allocation3], 256
    $region9: #{tpu_custom_call.1} parent=1 // pred_fallthru
      _
    %v23 = vld [vmem:[#allocation2] sm:$0xff]
    %v24 = vld [vmem:[#allocation2 + $0x8] sm:$0xff]
    %25 = vst [vmem:[#allocation5] sm:$0xff] %v23
    %26 = vst [vmem:[#allocation5 + $0x8] sm:$0xff] %v24
    // Predicated region
    $region10: #{tpu_custom_call.1} parent=1 // pred_check
      _
    $region11: #{tpu_custom_call.1} parent=1 // pred_check_branch
      %28 = sbr.rel (0) target = $region13
    $region12: #{tpu_custom_call.1} parent=1 // pred_region
      %s30 = ssub.s32 256, 256
      %31 = vsyncadd [#allocation4], %s30
      %s32 = sshll.u32 [#allocation5], 4
      %s33 = int_to_ptr.vmem [resolvable:$true] %s32
      %38 = dma.vmem_to_hbm [thread:$0]  %s33, 256, %s1, [#allocation4], 128, 128, 8
    $region13: #{tpu_custom_call.1} parent=1 // pred_fallthru
      _
    // Predicated region
    $region14: #{tpu_custom_call.1} parent=1 // pred_check
      _
    $region15: #{tpu_custom_call.1} parent=1 // pred_check_branch
      %40 = sbr.rel (0) target = $region17
    $region16: #{tpu_custom_call.1} parent=1 // pred_region
      %41 = dma.done [#allocation4], 256
    $region17: #{tpu_custom_call.1} parent=1 // pred_fallthru
      _
    %42 = vsyncpa [#allocation3], 1
    %43 = vsyncpa [#allocation4], 1

</llo_original>
